<compile_context>
chip_gen: v7x
topology: tpu7x:2x2x1
jax: 0.10.0
libtpu: 0.0.40
codegen_flags: <defaults>
</compile_context>

<pallas_src>
import math

import jax
import jax.numpy as jnp
from jax.experimental import pallas as pl
from jax.experimental.pallas import tpu as pltpu


def _residual_linear_kernel(x_ref, w_ref, b_ref, o_ref, acc_ref):
    # x_ref  : (tm, tk)  input rows (K slice)
    # w_ref  : (tk, tn)  pre-transposed weight stripe, (in, out) layout
    # b_ref  : (1, tn)   bias slice (f32)
    # o_ref  : (tm, tn)  output tile
    # acc_ref: (tm, tn)  f32 accumulator, resident across the K grid axis
    k = pl.program_id(2)

    @pl.when(k == 0)
    def _():
        acc_ref[...] = jnp.zeros_like(acc_ref)

    # Canonical (tm,tk)x(tk,tn) contraction on the MXU, f32 accumulation.
    acc_ref[...] += jnp.dot(x_ref[...], w_ref[...],
                            preferred_element_type=jnp.float32)

    @pl.when(k == pl.num_programs(2) - 1)
    def _():
        y = acc_ref[...] + b_ref[...].astype(jnp.float32)
        r = jnp.maximum(y, 0.0)
        # PyTorch inplace relu_(y) + y aliases y -> result is exactly 2*relu(y).
        o_ref[...] = (r + r).astype(o_ref.dtype)


def _round_up(a, b):
    return int(pl.cdiv(a, b) * b)


def _pick_divisor_tile(dim, candidates):
    for c in candidates:
        if dim % c == 0:
            return c
    return dim


def prepare_residual_linear_params(weight, bias, *, use_bf16=True):
    """One-time parameter preprocessing (hoist out of the per-step hot path):
    transpose the PyTorch (out, in) weight to (in, out), zero-pad to a
    lane-dense multiple of 128 and cast (bf16 by default)."""
    H = weight.shape[0]
    assert weight.shape == (H, H) and bias.shape == (H,)
    Hp = _round_up(H, 128)
    compute_dtype = jnp.bfloat16 if use_bf16 else weight.dtype

    w_t = weight.T                                   # (in, out)
    if Hp != H:
        w_t = jnp.pad(w_t, ((0, Hp - H), (0, Hp - H)))
    w_t = w_t.astype(compute_dtype)

    b_row = bias
    if Hp != H:
        b_row = jnp.pad(bias, (0, Hp - H))
    b_row = b_row.reshape(1, Hp).astype(jnp.float32)  # bias added in f32
    return w_t, b_row


def residual_linear(x2d, w_t, b_row):
    """x2d: (M, H) activations.  w_t: (Hp, Hp) prepared weight in (in, out)
    layout.  b_row: (1, Hp) f32 bias.  Returns (M, H) in x2d.dtype."""
    M, H = x2d.shape
    Hp = w_t.shape[0]
    assert w_t.shape == (Hp, Hp) and b_row.shape == (1, Hp)
    assert Hp % 128 == 0 and H <= Hp

    out_dtype = x2d.dtype
    compute_dtype = w_t.dtype
    elt = jnp.dtype(compute_dtype).itemsize
    out_elt = jnp.dtype(out_dtype).itemsize

    # ---- tile selection -----------------------------------------------------
    tk = _pick_divisor_tile(Hp, (512, 256, 128))      # reduction tile
    tn = _pick_divisor_tile(Hp, (512, 256, 128))      # output-column tile

    # Row tile: collapse the M grid axis for small/medium batches so the whole
    # weight streams from HBM exactly once; otherwise 512-row tiles.
    sub = max(8, 32 // elt)                           # 8 (f32) / 16 (bf16)
    Mp = _round_up(M, sub)
    if Mp <= 1024:
        tm = Mp
    else:
        tm = 512
        Mp = _round_up(M, tm)

    # v7x megacore: if the M axis collapsed, keep >=2 parallel blocks along N
    # when the hidden dim allows it (both TensorCores get work).
    if Mp // tm == 1:
        while tn > 128 and Hp // tn < 2:
            tn //= 2

    # ---- pad / cast activations (weights were prepared once, outside) -------
    xp = x2d
    if (Mp, Hp) != (M, H):
        xp = jnp.pad(x2d, ((0, Mp - M), (0, Hp - H)))
    xp = xp.astype(compute_dtype)

    grid = (Mp // tm, Hp // tn, Hp // tk)

    # Advisory cost: operands are re-streamed once per opposite grid axis.
    cost = pl.CostEstimate(
        flops=2 * Mp * Hp * Hp,
        transcendentals=0,
        bytes_accessed=(Mp * Hp * elt * (Hp // tn)        # x (per N tile)
                        + Hp * Hp * elt * (Mp // tm)      # W (per M tile)
                        + Hp * 4 * (Mp // tm)             # bias
                        + Mp * Hp * out_elt),             # output
    )

    # Double-buffered tiles + accumulator; cap with headroom for v7x (64 MiB).
    vmem_needed = (2 * tm * tk * elt + 2 * tk * tn * elt + 2 * tn * 4
                   + 2 * tm * tn * out_elt + tm * tn * 4)
    vmem_limit = int(min(48 << 20, max(32 << 20, 2 * vmem_needed)))

    out_padded = pl.pallas_call(
        _residual_linear_kernel,
        out_shape=jax.ShapeDtypeStruct((Mp, Hp), out_dtype),
        grid_spec=pltpu.PrefetchScalarGridSpec(
            num_scalar_prefetch=0,
            grid=grid,
            in_specs=[
                pl.BlockSpec((tm, tk), lambda i, j, k: (i, k)),  # x rows / K slice
                pl.BlockSpec((tk, tn), lambda i, j, k: (k, j)),  # W^T (in,out) stripe
                pl.BlockSpec((1, tn), lambda i, j, k: (0, j)),   # bias slice
            ],
            out_specs=pl.BlockSpec((tm, tn), lambda i, j, k: (i, j)),
            scratch_shapes=[pltpu.VMEM((tm, tn), jnp.float32)],
        ),
        compiler_params=pltpu.CompilerParams(
            dimension_semantics=("parallel", "parallel", "arbitrary"),
            vmem_limit_bytes=vmem_limit,
        ),
        cost_estimate=cost,
    )(xp, w_t, b_row)

    if (Mp, Hp) != (M, H):
        out_padded = out_padded[:M, :H]
    return out_padded


def residual_linear_module(x, weight, bias, *, use_bf16=True):
    """Matches the PyTorch module call: x (..., hiddim), weight (out, in),
    bias (out,).  In a real model, call prepare_residual_linear_params once
    and reuse the prepared params across steps."""
    H = x.shape[-1]
    lead = x.shape[:-1]
    w_t, b_row = prepare_residual_linear_params(weight, bias, use_bf16=use_bf16)
    out2d = residual_linear(x.reshape(-1, H), w_t, b_row)
    return out2d.reshape(*lead, H)


if __name__ == "__main__":
    # Small shapes: batch=2, seq=8, hiddim=32 (M = 16 rows after flattening).
    batch, seq, hiddim = 2, 8, 32
    key = jax.random.PRNGKey(0)
    kx, kw, kb = jax.random.split(key, 3)

    x = jax.random.normal(kx, (batch, seq, hiddim), dtype=jnp.float32)
    # PyTorch Linear stores weight as (out, in); deterministic synthetic params.
    bound = 1.0 / math.sqrt(hiddim)
    weight = jax.random.uniform(kw, (hiddim, hiddim), dtype=jnp.float32,
                                minval=-bound, maxval=bound)
    bias = jax.random.uniform(kb, (hiddim,), dtype=jnp.float32,
                              minval=-bound, maxval=bound)

    # Reference (exact inplace-ReLU semantics of the module).
    y_ref = x @ weight.T + bias
    ref = 2.0 * jnp.maximum(y_ref, 0.0)

    # f32 operand path: exact check at tight tolerance.
    out_f32 = jax.block_until_ready(
        residual_linear_module(x, weight, bias, use_bf16=False))
    assert out_f32.shape == ref.shape
    assert jnp.allclose(out_f32, ref, atol=1e-5, rtol=1e-5), "f32 mismatch"

    # Default bf16 operand path (f32 accumulation): looser tolerance.
    out_bf16 = jax.block_until_ready(
        residual_linear_module(x, weight, bias, use_bf16=True))
    assert out_bf16.shape == ref.shape
    assert jnp.allclose(out_bf16, ref, atol=3e-2, rtol=3e-2), "bf16 mismatch"

    print("KERNEL_OK")
</pallas_src>

<mosaic_0001>
module attributes {stable_mosaic.version = 11 : i64} {
  func.func @_residual_linear_kernel(%arg0: i32, %arg1: i32, %arg2: i32, %arg3: memref<16x128xf32, #tpu.memory_space<vmem>>, %arg4: memref<128x128xf32, #tpu.memory_space<vmem>>, %arg5: memref<1x128xf32, #tpu.memory_space<vmem>>, %arg6: memref<16x128xf32, #tpu.memory_space<vmem>>, %arg7: memref<16x128xf32, #tpu.memory_space<vmem>>) attributes {dimension_semantics = [#tpu.dimension_semantics<parallel>, #tpu.dimension_semantics<parallel>, #tpu.dimension_semantics<arbitrary>], iteration_bounds = array<i64: 1, 1, 1>, scalar_prefetch = 0 : i64, scratch_operands = 1 : i64, tpu.core_type = #tpu.core_type<tc>, window_params = [{transform_indices = @transform_0, window_bounds = array<i64: 16, 128>}, {transform_indices = @transform_1, window_bounds = array<i64: 128, 128>}, {transform_indices = @transform_2, window_bounds = array<i64: 1, 128>}, {transform_indices = @transform_3, window_bounds = array<i64: 16, 128>}]} {
    %c0_i32 = arith.constant 0 : i32
    %0 = arith.cmpi eq, %arg2, %c0_i32 : i32
    %1 = arith.extui %0 : i1 to i32
    %c0_i32_0 = arith.constant 0 : i32
    %2 = arith.cmpi ne, %1, %c0_i32_0 : i32
    scf.if %2 {
      %cst_10 = arith.constant 0.000000e+00 : f32
      %12 = vector.broadcast %cst_10 : f32 to vector<16x128xf32>
      %c0_11 = arith.constant 0 : index
      %c0_12 = arith.constant 0 : index
      %13 = vector.load %arg7[%c0_11, %c0_12] : memref<16x128xf32, #tpu.memory_space<vmem>>, vector<16x128xf32>
      tpu.vector_store %arg7[%c0_11, %c0_12], %12 {strides = array<i32>} : memref<16x128xf32, #tpu.memory_space<vmem>>, vector<16x128xf32>,
    } else {
    }
    %c0 = arith.constant 0 : index
    %c0_1 = arith.constant 0 : index
    %3 = vector.load %arg7[%c0, %c0_1] : memref<16x128xf32, #tpu.memory_space<vmem>>, vector<16x128xf32>
    %c0_2 = arith.constant 0 : index
    %c0_3 = arith.constant 0 : index
    %4 = vector.load %arg3[%c0_2, %c0_3] : memref<16x128xf32, #tpu.memory_space<vmem>>, vector<16x128xf32>
    %c0_4 = arith.constant 0 : index
    %c0_5 = arith.constant 0 : index
    %5 = vector.load %arg4[%c0_4, %c0_5] : memref<128x128xf32, #tpu.memory_space<vmem>>, vector<128x128xf32>
    %cst = arith.constant dense<0.000000e+00> : vector<16x128xf32>
    %6 = tpu.matmul %4, %5, %cst {dimension_numbers = #tpu.dot_dimension_numbers<[1], [0], [0], [1], [0, 0, 1, 1], [], []>} : vector<16x128xf32>, vector<128x128xf32>, vector<16x128xf32> -> vector<16x128xf32>
    %7 = arith.addf %3, %6 : vector<16x128xf32>
    %c0_6 = arith.constant 0 : index
    %c0_7 = arith.constant 0 : index
    %8 = vector.load %arg7[%c0_6, %c0_7] : memref<16x128xf32, #tpu.memory_space<vmem>>, vector<16x128xf32>
    tpu.vector_store %arg7[%c0_6, %c0_7], %7 {strides = array<i32>} : memref<16x128xf32, #tpu.memory_space<vmem>>, vector<16x128xf32>,
    %c0_i32_8 = arith.constant 0 : i32
    %9 = arith.cmpi eq, %arg2, %c0_i32_8 : i32
    %10 = arith.extui %9 : i1 to i32
    %c0_i32_9 = arith.constant 0 : i32
    %11 = arith.cmpi ne, %10, %c0_i32_9 : i32
    scf.if %11 {
      %c0_10 = arith.constant 0 : index
      %c0_11 = arith.constant 0 : index
      %12 = vector.load %arg7[%c0_10, %c0_11] : memref<16x128xf32, #tpu.memory_space<vmem>>, vector<16x128xf32>
      %c0_12 = arith.constant 0 : index
      %c0_13 = arith.constant 0 : index
      %13 = vector.load %arg5[%c0_12, %c0_13] : memref<1x128xf32, #tpu.memory_space<vmem>>, vector<1x128xf32>
      %14 = vector.broadcast %13 : vector<1x128xf32> to vector<16x128xf32>
      %15 = arith.addf %12, %14 : vector<16x128xf32>
      %cst_14 = arith.constant 0.000000e+00 : f32
      %16 = vector.broadcast %cst_14 : f32 to vector<16x128xf32>
      %17 = arith.maximumf %15, %16 : vector<16x128xf32>
      %18 = arith.addf %17, %17 : vector<16x128xf32>
      %c0_15 = arith.constant 0 : index
      %c0_16 = arith.constant 0 : index
      %19 = vector.load %arg6[%c0_15, %c0_16] : memref<16x128xf32, #tpu.memory_space<vmem>>, vector<16x128xf32>
      tpu.vector_store %arg6[%c0_15, %c0_16], %18 {strides = array<i32>} : memref<16x128xf32, #tpu.memory_space<vmem>>, vector<16x128xf32>,
    } else {
    }
    return
  }
  func.func @transform_0(%arg0: i32, %arg1: i32, %arg2: i32) -> (i32, i32) {
    %c0_i32 = arith.constant 0 : i32
    return %arg0, %arg2 : i32, i32
  }
  func.func @transform_1(%arg0: i32, %arg1: i32, %arg2: i32) -> (i32, i32) {
    %c0_i32 = arith.constant 0 : i32
    return %arg2, %arg1 : i32, i32
  }
  func.func @transform_2(%arg0: i32, %arg1: i32, %arg2: i32) -> (i32, i32) {
    %c0_i32 = arith.constant 0 : i32
    %c0_i32_0 = arith.constant 0 : i32
    return %c0_i32, %arg1 : i32, i32
  }
  func.func @transform_3(%arg0: i32, %arg1: i32, %arg2: i32) -> (i32, i32) {
    %c0_i32 = arith.constant 0 : i32
    return %arg0, %arg1 : i32, i32
  }
}

</mosaic_0001>

<llo_original>
// kernel: tpu_custom_call.1
$region0: #{tpu_custom_call.1}
  #allocation0 [shape = 'u32[]', space=smem, size = 0x4, offset = 0x4, fixed_abs, tag = 'smem constant byte address 0x4 - core index']
  #allocation1 [shape = 'u32[144,128]{1,0:T(1,128)}', space=vmem, size = 0x12000, scoped, tag = 'internal scratch']
  #allocation2 [shape = 'f32[16,128]{1,0:T(8,128)}', space=vmem, size = 0x2000, scoped, tag = 'scratch operand']
  %s0 = inlined_call_operand.hbm [shape: f32[16,128], index: 0, kind: input, shape index: {}]
  %s1 = inlined_call_operand.hbm [shape: f32[128,128], index: 1, kind: input, shape index: {}]
  %s2 = inlined_call_operand.vmem [shape: f32[1,128], index: 2, kind: input, shape index: {}]
  %s3 = inlined_call_operand.hbm [shape: f32[16,128], index: 3, kind: output, shape index: {}]
  %s4 = sld [smem:[#allocation0]]
  $region38: #{tpu_custom_call.1} parent=0
    _
  %s6 = ssub.s32 1, %s4
  %s7 = scalar_select 0, %s6, %s4
  $region1: #{tpu_custom_call.1} parent=0
    #allocation3 [shape = 'u8[8192]{0}', space=vmem, size = 0x2000, scoped, tag = 'input window, operand 0, single buffered']
    #allocation4 [shape = 's32[1]{0}', space=sflag, size = 0x4, scoped, tag = 'scoped memory for tpu_custom_call.1']
    #allocation5 [shape = 's32[1]{0}', space=sflag, size = 0x4, scoped, tag = 'scoped memory for tpu_custom_call.1']
    #allocation6 [shape = 'u8[65536]{0}', space=vmem, size = 0x10000, scoped, tag = 'input window, operand 1, single buffered']
    #allocation7 [shape = 's32[1]{0}', space=sflag, size = 0x4, scoped, tag = 'scoped memory for tpu_custom_call.1']
    #allocation8 [shape = 'u8[8192]{0}', space=vmem, size = 0x2000, scoped, tag = 'output window, operand 0, single buffered']
    %8 = vsyncpa [#allocation4], 0
    %9 = vsyncpa [#allocation7], 0
    %10 = vsyncpa [#allocation5], 0
    // Predicated region
    $region2: #{tpu_custom_call.1} parent=1 // pred_check
      _
    $region3: #{tpu_custom_call.1} parent=1 // pred_check_branch
      %12 = sbr.rel (0) target = $region5
    $region4: #{tpu_custom_call.1} parent=1 // pred_region
      %s14 = ssub.s32 256, 256
      %15 = vsyncadd [#allocation4], %s14
      %s16 = sshll.u32 [#allocation3], 4
      %s17 = int_to_ptr.vmem [resolvable:$true] %s16
      %22 = dma.hbm_to_vmem [thread:$0]  %s0, 256, %s17, [#allocation4], 128, 128, 8
    $region5: #{tpu_custom_call.1} parent=1 // pred_fallthru
      _
    // Predicated region
    $region6: #{tpu_custom_call.1} parent=1 // pred_check
      _
    $region7: #{tpu_custom_call.1} parent=1 // pred_check_branch
      %24 = sbr.rel (0) target = $region9
    $region8: #{tpu_custom_call.1} parent=1 // pred_region
      %s26 = ssub.s32 2048, 2048
      %27 = vsyncadd [#allocation7], %s26
      %s28 = sshll.u32 [#allocation6], 4
      %s29 = int_to_ptr.vmem [resolvable:$true] %s28
      %34 = dma.hbm_to_vmem [thread:$0]  %s1, 2048, %s29, [#allocation7], 128, 128, 8
    $region9: #{tpu_custom_call.1} parent=1 // pred_fallthru
      _
    // Predicated region
    $region10: #{tpu_custom_call.1} parent=1 // pred_check
      _
    $region11: #{tpu_custom_call.1} parent=1 // pred_check_branch
      %36 = sbr.rel (0) target = $region13
    $region12: #{tpu_custom_call.1} parent=1 // pred_region
      _
    $region13: #{tpu_custom_call.1} parent=1 // pred_fallthru
      _
    // Predicated region
    $region14: #{tpu_custom_call.1} parent=1 // pred_check
      _
    $region15: #{tpu_custom_call.1} parent=1 // pred_check_branch
      %38 = sbr.rel (0) target = $region17
    $region16: #{tpu_custom_call.1} parent=1 // pred_region
      %39 = dma.done [#allocation4], 256
    $region17: #{tpu_custom_call.1} parent=1 // pred_fallthru
      _
    // Predicated region
    $region18: #{tpu_custom_call.1} parent=1 // pred_check
      _
    $region19: #{tpu_custom_call.1} parent=1 // pred_check_branch
      %41 = sbr.rel (0) target = $region21
    $region20: #{tpu_custom_call.1} parent=1 // pred_region
      %42 = dma.done [#allocation7], 2048
    $region21: #{tpu_custom_call.1} parent=1 // pred_fallthru
      _
    %p43 = scmp.eq.s32.totalorder 0, 0
    // Predicated region
    $region22: #{tpu_custom_call.1} parent=1 // pred_check
      %p44 = pneg %p43
    $region23: #{tpu_custom_call.1} parent=1 // pred_check_branch
      %46 = sbr.rel (%p44) target = $region25
    $region24: #{tpu_custom_call.1} parent=1 // pred_region
      %47 = vst [vmem:[#allocation2] sm:$0xff] 0.0
      %48 = vst [vmem:[#allocation2 + $0x8] sm:$0xff] 0.0
    $region25: #{tpu_custom_call.1} parent=1 // pred_fallthru
      _
    %v49 = vld [vmem:[#allocation2] sm:$0xff]
    %v50 = vld [vmem:[#allocation2 + $0x8] sm:$0xff]
    %v51 = vld [vmem:[#allocation3] sm:$0xff]
    %v52 = vld [vmem:[#allocation3 + $0x8] sm:$0xff]
    %v53 = vld [vmem:[#allocation6] sm:$0xff]
    %v54 = vld [vmem:[#allocation6 + $0x8] sm:$0xff]
    %v55 = vld [vmem:[#allocation6 + $0x10] sm:$0xff]
    %v56 = vld [vmem:[#allocation6 + $0x18] sm:$0xff]
    %v57 = vld [vmem:[#allocation6 + $0x20] sm:$0xff]
    %v58 = vld [vmem:[#allocation6 + $0x28] sm:$0xff]
    %v59 = vld [vmem:[#allocation6 + $0x30] sm:$0xff]
    %v60 = vld [vmem:[#allocation6 + $0x38] sm:$0xff]
    %v61 = vld [vmem:[#allocation6 + $0x40] sm:$0xff]
    %v62 = vld [vmem:[#allocation6 + $0x48] sm:$0xff]
    %v63 = vld [vmem:[#allocation6 + $0x50] sm:$0xff]
    %v64 = vld [vmem:[#allocation6 + $0x58] sm:$0xff]
    %v65 = vld [vmem:[#allocation6 + $0x60] sm:$0xff]
    %v66 = vld [vmem:[#allocation6 + $0x68] sm:$0xff]
    %v67 = vld [vmem:[#allocation6 + $0x70] sm:$0xff]
    %v68 = vld [vmem:[#allocation6 + $0x78] sm:$0xff]
    %69 = vmatprep.subr.mxu0 0.0
    %70 = vmatpush1.msra.mxu0 %v53
    %71 = vmatprep.subr.mxu0 0.0
    %72 = vmatpush1.msra.mxu0 %v54
    %73 = vmatprep.subr.mxu0 0.0
    %74 = vmatpush1.msra.mxu0 %v55
    %75 = vmatprep.subr.mxu0 0.0
    %76 = vmatpush1.msra.mxu0 %v56
    %77 = vmatprep.subr.mxu0 0.0
    %78 = vmatpush1.msra.mxu0 %v57
    %79 = vmatprep.subr.mxu0 0.0
    %80 = vmatpush1.msra.mxu0 %v58
    %81 = vmatprep.subr.mxu0 0.0
    %82 = vmatpush1.msra.mxu0 %v59
    %83 = vmatprep.subr.mxu0 0.0
    %84 = vmatpush1.msra.mxu0 %v60
    %85 = vmatprep.subr.mxu0 0.0
    %86 = vmatpush1.msra.mxu0 %v61
    %87 = vmatprep.subr.mxu0 0.0
    %88 = vmatpush1.msra.mxu0 %v62
    %89 = vmatprep.subr.mxu0 0.0
    %90 = vmatpush1.msra.mxu0 %v63
    %91 = vmatprep.subr.mxu0 0.0
    %92 = vmatpush1.msra.mxu0 %v64
    %93 = vmatprep.subr.mxu0 0.0
    %94 = vmatpush1.msra.mxu0 %v65
    %95 = vmatprep.subr.mxu0 0.0
    %96 = vmatpush1.msra.mxu0 %v66
    %97 = vmatprep.subr.mxu0 0.0
    %98 = vmatpush1.msra.mxu0 %v67
    %99 = vmatprep.subr.mxu0 0.0
    %100 = vmatpush1.msra.mxu0 %v68
    %101 = vmatprep.subr.mxu0 0.0
    %102 = vmatpush1.msra.mxu0 0.0
    %103 = vmatprep.subr.mxu0 0.0
    %104 = vmatpush1.msra.mxu0 0.0
    %105 = vmatprep.subr.mxu0 0.0
    %106 = vmatpush1.msra.mxu0 0.0
    %107 = vmatprep.subr.mxu0 0.0
    %108 = vmatpush1.msra.mxu0 0.0
    %109 = vmatprep.subr.mxu0 0.0
    %110 = vmatpush1.msra.mxu0 0.0
    %111 = vmatprep.subr.mxu0 0.0
    %112 = vmatpush1.msra.mxu0 0.0
    %113 = vmatprep.subr.mxu0 0.0
    %114 = vmatpush1.msra.mxu0 0.0
    %115 = vmatprep.subr.mxu0 0.0
    %116 = vmatpush1.msra.mxu0 0.0
    %117 = vmatprep.subr.mxu0 0.0
    %118 = vmatpush1.msra.mxu0 0.0
    %119 = vmatprep.subr.mxu0 0.0
    %120 = vmatpush1.msra.mxu0 0.0
    %121 = vmatprep.subr.mxu0 0.0
    %122 = vmatpush1.msra.mxu0 0.0
    %123 = vmatprep.subr.mxu0 0.0
    %124 = vmatpush1.msra.mxu0 0.0
    %125 = vmatprep.subr.mxu0 0.0
    %126 = vmatpush1.msra.mxu0 0.0
    %127 = vmatprep.subr.mxu0 0.0
    %128 = vmatpush1.msra.mxu0 0.0
    %129 = vmatprep.subr.mxu0 0.0
    %130 = vmatpush1.msra.mxu0 0.0
    %131 = vmatprep.subr.mxu0 0.0
    %132 = vmatpush1.msra.mxu0 0.0
    %133 = vmatprep.mubr.f32.mxu0 0.0
    %134 = vmatmul.mubr.f32.gmra.mrb[0].mxu0 %v51
    %v135 = vpop.f32.mrb[0].mxu0
    %v136 = vadd.f32 0.0, %v135
    %v137 = vpop.f32.mrb[0].mxu0
    %138 = vmatprep.mubr.f32.mxu0 0.0
    %139 = vmatmul.mubr.f32.gmra.mrb[0].mxu0 %v52
    %v140 = vpop.f32.mrb[0].mxu0
    %v141 = vadd.f32 0.0, %v140
    %v142 = vpop.f32.mrb[0].mxu0
    %143 = vdwg.mxu0
    %v144 = vadd.f32 %v49, %v136
    %v145 = vadd.f32 %v50, %v141
    %146 = vst [vmem:[#allocation2] sm:$0xff] %v144
    %147 = vst [vmem:[#allocation2 + $0x8] sm:$0xff] %v145
    // Predicated region
    $region26: #{tpu_custom_call.1} parent=1 // pred_check
      %p148 = pneg %p43
    $region27: #{tpu_custom_call.1} parent=1 // pred_check_branch
      %150 = sbr.rel (%p148) target = $region29
    $region28: #{tpu_custom_call.1} parent=1 // pred_region
      %v151 = vld [vmem:[#allocation2] sm:$0xff]
      %v152 = vld [vmem:[#allocation2 + $0x8] sm:$0xff]
      %v153 = vld [vmem:[%s2] sm:$0x1]
      %v155 = vlaneseq
      %v156 = vshrl.u32 %v155, 7
      %v157 = vsub.s32 0, %v156
      %v158 = vrot.slane %v153, %v157
      %v160 = vadd.f32 %v151, %v158
      %v161 = vadd.f32 %v152, %v158
      %v162 = vmax.f32 %v160, 0.0
      %v163 = vmax.f32 %v161, 0.0
      %v164 = vadd.f32 %v162, %v162
      %v165 = vadd.f32 %v163, %v163
      %166 = vst [vmem:[#allocation8] sm:$0xff] %v164
      %167 = vst [vmem:[#allocation8 + $0x8] sm:$0xff] %v165
    $region29: #{tpu_custom_call.1} parent=1 // pred_fallthru
      _
    // Predicated region
    $region30: #{tpu_custom_call.1} parent=1 // pred_check
      _
    $region31: #{tpu_custom_call.1} parent=1 // pred_check_branch
      %169 = sbr.rel (0) target = $region33
    $region32: #{tpu_custom_call.1} parent=1 // pred_region
      %s171 = ssub.s32 256, 256
      %172 = vsyncadd [#allocation5], %s171
      %s173 = sshll.u32 [#allocation8], 4
      %s174 = int_to_ptr.vmem [resolvable:$true] %s173
      %179 = dma.vmem_to_hbm [thread:$0]  %s174, 256, %s3, [#allocation5], 128, 128, 8
    $region33: #{tpu_custom_call.1} parent=1 // pred_fallthru
      _
    // Predicated region
    $region34: #{tpu_custom_call.1} parent=1 // pred_check
      _
    $region35: #{tpu_custom_call.1} parent=1 // pred_check_branch
      %181 = sbr.rel (0) target = $region37
    $region36: #{tpu_custom_call.1} parent=1 // pred_region
      %182 = dma.done [#allocation5], 256
    $region37: #{tpu_custom_call.1} parent=1 // pred_fallthru
      _
    %183 = vsyncpa [#allocation4], 1
    %184 = vsyncpa [#allocation7], 1
    %185 = vsyncpa [#allocation5], 1

</llo_original>
